<compile_context>
chip_gen: v5e
topology: v5e:2x2
jax: 0.10.0
libtpu: 0.0.40
codegen_flags: <defaults>
</compile_context>

<pallas_src>
import jax
import jax.numpy as jnp
from jax.experimental import pallas as pl
from jax.experimental.pallas import tpu as pltpu


def _round_up(x, m):
    return (x + m - 1) // m * m


def _vmem_budget_bytes():
    """Usable per-core VMEM budget (generation aware)."""
    try:
        cap = int(pltpu.get_tpu_info().vmem_capacity_bytes)
    except Exception:
        cap = 64 * 2**20      # conservative fallback = v7x per-TensorCore VMEM
    return (cap * 4) // 5     # leave ~20% headroom for compiler-internal scratch


def _gmp_kernel(ns_ref, n2e_ref, e2n_ref, out_ref, acc_ref, deg_ref):
    # ns_ref : (N, D)   node_state, resident across the whole edge loop
    # n2e_ref: (te, N)  node2edge tile for this edge step
    # e2n_ref: (N, te)  edge2node tile for this edge step
    # out_ref: (N, D)   output block (written once, at the last edge step)
    # acc_ref: (N, D)   f32 accumulator scratch
    # deg_ref: (N, 1)   f32 running node degree
    e = pl.program_id(1)

    @pl.when(e == 0)
    def _init():
        acc_ref[...] = jnp.zeros_like(acc_ref)
        deg_ref[...] = jnp.zeros_like(deg_ref)

    n2e = n2e_ref[...]                 # stored dtype; no f32 upcast of the big tiles
    e2n = e2n_ref[...]

    # matmul #1 (MXU): edge embeddings for this edge tile, f32 accumulation.
    edge_emb = jnp.dot(n2e, ns_ref[...], preferred_element_type=jnp.float32)
    # matmul #2 (MXU): aggregate this edge tile onto the nodes.  Only the small
    # (te, D) edge_emb is downcast so both operands share the stored dtype.
    acc_ref[...] += jnp.dot(e2n, edge_emb.astype(e2n.dtype),
                            preferred_element_type=jnp.float32)
    # Running node degree for the (+1) normalization; f32 accumulation.
    deg_ref[...] += jnp.sum(e2n, axis=1, keepdims=True, dtype=jnp.float32)

    @pl.when(e == pl.num_programs(1) - 1)
    def _finalize():
        inv_norm = pl.reciprocal(deg_ref[...] + 1.0, approx=False)   # exact
        out_ref[...] = ((acc_ref[...] + ns_ref[...].astype(jnp.float32))
                        * inv_norm).astype(out_ref.dtype)


def graph_message_passing(node_state, node2edge, edge2node, *, te=None,
                          vmem_budget_bytes=None):
    """agg = (edge2node @ (node2edge @ node_state) + node_state) / (deg + 1).

    Pass bf16 incidence matrices (exact for 0/1 entries) to halve the dominant
    HBM traffic; node_state (tiny by comparison) is cast to the incidence dtype
    so both MXU operands match.  All accumulation happens in f32.
    """
    B, N, D = node_state.shape
    assert node2edge.ndim == 3 and node2edge.shape[0] == B and node2edge.shape[2] == N
    E = node2edge.shape[1]
    assert edge2node.shape == (B, N, E)
    out_dtype = node_state.dtype

    inc_dtype = jnp.result_type(node2edge.dtype, edge2node.dtype)
    node2edge = node2edge.astype(inc_dtype)
    edge2node = edge2node.astype(inc_dtype)
    ns = node_state.astype(inc_dtype)

    budget = int(vmem_budget_bytes) if vmem_budget_bytes else _vmem_budget_bytes()
    inc_b = jnp.dtype(inc_dtype).itemsize
    out_b = jnp.dtype(out_dtype).itemsize
    n_sub, n_lane = _round_up(N, 8), _round_up(N, 128)
    d_lane = _round_up(D, 128)

    # VMEM footprint model (counts double-buffering of every pipelined operand
    # and the transient f32 widening of the degree reduce).
    fixed_vmem = (2 * n_sub * d_lane * inc_b      # resident node_state (x2 buffers)
                  + 2 * n_sub * d_lane * out_b    # output block (x2 buffers)
                  + n_sub * d_lane * 4            # f32 accumulator scratch
                  + n_sub * 128 * 4               # degree scratch (lane padded)
                  + (2 << 20))                    # misc slack

    def tile_vmem(t):
        t_sub, t_lane = _round_up(t, 8), _round_up(t, 128)
        return (2 * t_sub * n_lane * inc_b        # node2edge tile (x2 buffers)
                + 2 * n_sub * t_lane * inc_b      # edge2node tile (x2 buffers)
                + n_sub * t_lane * 4              # f32 widening of the degree reduce
                + t_sub * d_lane * (4 + inc_b))   # edge_emb (f32) + its downcast

    if te is None:
        cands = [c for c in (2048, 1024, 512, 256, 128) if c < E]
        if E <= 8192:
            cands.append(E)                        # single-step, no-padding option
        fitting = [c for c in cands if fixed_vmem + tile_vmem(c) <= budget]
        if fitting:
            # least E padding first, then the biggest tile (fewest grid steps)
            te = min(fitting, key=lambda c: (pl.cdiv(E, c) * c, -c))
        else:
            te = 128
            # TODO(synk): also tile the node dimension (with edge-embedding
            # caching) for graphs whose resident (N, D) state/acc exceed VMEM.
    else:
        te = int(te)
        te = E if te >= E else max(128, (te // 128) * 128)

    e_tiles = pl.cdiv(E, te)
    e_pad = e_tiles * te
    if e_pad != E:
        # Zero padding along E is exact (phantom edges have zero incidence).
        # TODO(synk): mask the ragged last edge tile in-kernel instead, to avoid
        # this extra HBM pass over the incidence matrices.
        node2edge = jnp.pad(node2edge, ((0, 0), (0, e_pad - E), (0, 0)))
        edge2node = jnp.pad(edge2node, ((0, 0), (0, 0), (0, e_pad - E)))

    vmem_limit = int(min(budget, max(32 * 2**20, 2 * (fixed_vmem + tile_vmem(te)))))

    out = pl.pallas_call(
        _gmp_kernel,
        out_shape=jax.ShapeDtypeStruct((B, N, D), out_dtype),
        grid_spec=pltpu.PrefetchScalarGridSpec(
            num_scalar_prefetch=0,
            grid=(B, e_tiles),
            in_specs=[
                # node_state: full (N, D), resident across the edge loop.
                pl.BlockSpec((pl.Squeezed(), N, D), lambda b, e: (b, 0, 0)),
                # node2edge: one edge tile x full N (contraction of matmul #1).
                pl.BlockSpec((pl.Squeezed(), te, N), lambda b, e: (b, e, 0)),
                # edge2node: full N x one edge tile (contraction of matmul #2).
                pl.BlockSpec((pl.Squeezed(), N, te), lambda b, e: (b, 0, e)),
            ],
            out_specs=pl.BlockSpec((pl.Squeezed(), N, D), lambda b, e: (b, 0, 0)),
            scratch_shapes=[
                pltpu.VMEM((N, D), jnp.float32),    # f32 aggregation accumulator
                pltpu.VMEM((N, 1), jnp.float32),    # running node degree
            ],
        ),
        compiler_params=pltpu.CompilerParams(
            # TODO(synk): when B == 1 on dual-TensorCore chips (v7x), split the
            # node axis into a second "parallel" grid dim so both cores work.
            dimension_semantics=("parallel", "arbitrary"),
            vmem_limit_bytes=vmem_limit,
        ),
    )(ns, node2edge, edge2node)
    return out


def _reference(node_state, node2edge, edge2node):
    emb = jnp.einsum("ben,bnd->bed", node2edge, node_state, precision="highest")
    norm = jnp.sum(edge2node, axis=2, keepdims=True) + 1.0
    agg = jnp.einsum("bne,bed->bnd", edge2node, emb, precision="highest")
    return (agg + node_state) / norm


if __name__ == "__main__":
    B, N, E, D = 2, 16, 24, 32
    key = jax.random.PRNGKey(0)
    k1, k2, k3 = jax.random.split(key, 3)

    node_state = jax.random.normal(k1, (B, N, D), dtype=jnp.float32)
    # Incidence-like 0/1 matrices (typical graph adjacency usage).
    node2edge = (jax.random.uniform(k2, (B, E, N)) < 0.3).astype(jnp.float32)
    edge2node = (jax.random.uniform(k3, (B, N, E)) < 0.3).astype(jnp.float32)

    # 1) f32 path, single edge tile (te = E, no padding).
    ref = _reference(node_state, node2edge, edge2node)
    out = jax.block_until_ready(graph_message_passing(node_state, node2edge, edge2node))
    assert out.shape == (B, N, D) and out.dtype == node_state.dtype
    assert jnp.allclose(out, ref, atol=2e-3, rtol=2e-3), "f32 single-tile mismatch"

    # 2) f32 path, multi-step edge reduction (E = 384, te = 128 -> 3 grid steps).
    E2 = 384
    k4, k5 = jax.random.split(jax.random.PRNGKey(1))
    n2e2 = (jax.random.uniform(k4, (B, E2, N)) < 0.2).astype(jnp.float32)
    e2n2 = (jax.random.uniform(k5, (B, N, E2)) < 0.2).astype(jnp.float32)
    ref2 = _reference(node_state, n2e2, e2n2)
    out2 = jax.block_until_ready(graph_message_passing(node_state, n2e2, e2n2, te=128))
    assert jnp.allclose(out2, ref2, atol=2e-3, rtol=2e-3), "f32 multi-tile mismatch"

    # 3) Ragged edge count (E = 200, te = 128 -> zero-padded last tile).
    E3 = 200
    ref3 = _reference(node_state, n2e2[:, :E3], e2n2[:, :, :E3])
    out3 = jax.block_until_ready(
        graph_message_passing(node_state, n2e2[:, :E3], e2n2[:, :, :E3], te=128))
    assert jnp.allclose(out3, ref3, atol=2e-3, rtol=2e-3), "ragged-E mismatch"

    # 4) bf16 incidence storage (exact for 0/1; halves the dominant HBM bytes).
    ns_bf = node_state.astype(jnp.bfloat16)
    n2e_bf = n2e2.astype(jnp.bfloat16)
    e2n_bf = e2n2.astype(jnp.bfloat16)
    ref_bf = _reference(ns_bf.astype(jnp.float32), n2e_bf.astype(jnp.float32),
                        e2n_bf.astype(jnp.float32))
    out_bf = jax.block_until_ready(graph_message_passing(ns_bf, n2e_bf, e2n_bf, te=128))
    assert out_bf.dtype == jnp.bfloat16
    assert jnp.allclose(out_bf.astype(jnp.float32), ref_bf, atol=2e-2, rtol=2e-2), \
        "bf16 incidence mismatch"

    print("KERNEL_OK")
</pallas_src>

<mosaic_0001>
module attributes {stable_mosaic.version = 11 : i64} {
  func.func @_gmp_kernel(%arg0: i32, %arg1: i32, %arg2: memref<1x16x32xf32, #tpu.memory_space<vmem>>, %arg3: memref<1x24x16xf32, #tpu.memory_space<vmem>>, %arg4: memref<1x16x24xf32, #tpu.memory_space<vmem>>, %arg5: memref<1x16x32xf32, #tpu.memory_space<vmem>>, %arg6: memref<16x32xf32, #tpu.memory_space<vmem>>, %arg7: memref<16x1xf32, #tpu.memory_space<vmem>>) attributes {dimension_semantics = [#tpu.dimension_semantics<parallel>, #tpu.dimension_semantics<arbitrary>], iteration_bounds = array<i64: 2, 1>, scalar_prefetch = 0 : i64, scratch_operands = 2 : i64, tpu.core_type = #tpu.core_type<tc>, window_params = [{transform_indices = @transform_0, window_bounds = array<i64: 1, 16, 32>}, {transform_indices = @transform_1, window_bounds = array<i64: 1, 24, 16>}, {transform_indices = @transform_2, window_bounds = array<i64: 1, 16, 24>}, {transform_indices = @transform_3, window_bounds = array<i64: 1, 16, 32>}]} {
    %c0_i32 = arith.constant 0 : i32
    %0 = arith.cmpi eq, %arg1, %c0_i32 : i32
    %1 = arith.extui %0 : i1 to i32
    %c0_i32_0 = arith.constant 0 : i32
    %2 = arith.cmpi ne, %1, %c0_i32_0 : i32
    scf.if %2 {
      %cst_21 = arith.constant 0.000000e+00 : f32
      %22 = vector.broadcast %cst_21 : f32 to vector<16x32xf32>
      %c0_22 = arith.constant 0 : index
      %c0_23 = arith.constant 0 : index
      %23 = vector.load %arg6[%c0_22, %c0_23] : memref<16x32xf32, #tpu.memory_space<vmem>>, vector<16x32xf32>
      tpu.vector_store %arg6[%c0_22, %c0_23], %22 {strides = array<i32>} : memref<16x32xf32, #tpu.memory_space<vmem>>, vector<16x32xf32>,
      %cst_24 = arith.constant 0.000000e+00 : f32
      %24 = vector.broadcast %cst_24 : f32 to vector<16x1xf32>
      %c0_25 = arith.constant 0 : index
      %c0_26 = arith.constant 0 : index
      %25 = vector.load %arg7[%c0_25, %c0_26] : memref<16x1xf32, #tpu.memory_space<vmem>>, vector<16x1xf32>
      tpu.vector_store %arg7[%c0_25, %c0_26], %24 {strides = array<i32>} : memref<16x1xf32, #tpu.memory_space<vmem>>, vector<16x1xf32>,
    } else {
    }
    %c0 = arith.constant 0 : index
    %c0_1 = arith.constant 0 : index
    %c0_2 = arith.constant 0 : index
    %3 = vector.load %arg3[%c0, %c0_1, %c0_2] : memref<1x24x16xf32, #tpu.memory_space<vmem>>, vector<1x24x16xf32>
    %4 = vector.shape_cast %3 : vector<1x24x16xf32> to vector<24x16xf32>
    %c0_3 = arith.constant 0 : index
    %c0_4 = arith.constant 0 : index
    %c0_5 = arith.constant 0 : index
    %5 = vector.load %arg4[%c0_3, %c0_4, %c0_5] : memref<1x16x24xf32, #tpu.memory_space<vmem>>, vector<1x16x24xf32>
    %6 = vector.shape_cast %5 : vector<1x16x24xf32> to vector<16x24xf32>
    %c0_6 = arith.constant 0 : index
    %c0_7 = arith.constant 0 : index
    %c0_8 = arith.constant 0 : index
    %7 = vector.load %arg2[%c0_6, %c0_7, %c0_8] : memref<1x16x32xf32, #tpu.memory_space<vmem>>, vector<1x16x32xf32>
    %8 = vector.shape_cast %7 : vector<1x16x32xf32> to vector<16x32xf32>
    %cst = arith.constant dense<0.000000e+00> : vector<24x32xf32>
    %9 = tpu.matmul %4, %8, %cst {dimension_numbers = #tpu.dot_dimension_numbers<[1], [0], [0], [1], [0, 0, 1, 1], [], []>} : vector<24x16xf32>, vector<16x32xf32>, vector<24x32xf32> -> vector<24x32xf32>
    %c0_9 = arith.constant 0 : index
    %c0_10 = arith.constant 0 : index
    %10 = vector.load %arg6[%c0_9, %c0_10] : memref<16x32xf32, #tpu.memory_space<vmem>>, vector<16x32xf32>
    %cst_11 = arith.constant dense<0.000000e+00> : vector<16x32xf32>
    %11 = tpu.matmul %6, %9, %cst_11 {dimension_numbers = #tpu.dot_dimension_numbers<[1], [0], [0], [1], [0, 0, 1, 1], [], []>} : vector<16x24xf32>, vector<24x32xf32>, vector<16x32xf32> -> vector<16x32xf32>
    %12 = arith.addf %10, %11 : vector<16x32xf32>
    %c0_12 = arith.constant 0 : index
    %c0_13 = arith.constant 0 : index
    %13 = vector.load %arg6[%c0_12, %c0_13] : memref<16x32xf32, #tpu.memory_space<vmem>>, vector<16x32xf32>
    tpu.vector_store %arg6[%c0_12, %c0_13], %12 {strides = array<i32>} : memref<16x32xf32, #tpu.memory_space<vmem>>, vector<16x32xf32>,
    %c0_14 = arith.constant 0 : index
    %c0_15 = arith.constant 0 : index
    %14 = vector.load %arg7[%c0_14, %c0_15] : memref<16x1xf32, #tpu.memory_space<vmem>>, vector<16x1xf32>
    %cst_16 = arith.constant dense<0.000000e+00> : vector<16xf32>
    %15 = vector.multi_reduction <add>, %6, %cst_16 [1] : vector<16x24xf32> to vector<16xf32>
    %16 = vector.shape_cast %15 : vector<16xf32> to vector<16x1xf32>
    %17 = arith.addf %14, %16 : vector<16x1xf32>
    %c0_17 = arith.constant 0 : index
    %c0_18 = arith.constant 0 : index
    %18 = vector.load %arg7[%c0_17, %c0_18] : memref<16x1xf32, #tpu.memory_space<vmem>>, vector<16x1xf32>
    tpu.vector_store %arg7[%c0_17, %c0_18], %17 {strides = array<i32>} : memref<16x1xf32, #tpu.memory_space<vmem>>, vector<16x1xf32>,
    %c0_i32_19 = arith.constant 0 : i32
    %19 = arith.cmpi eq, %arg1, %c0_i32_19 : i32
    %20 = arith.extui %19 : i1 to i32
    %c0_i32_20 = arith.constant 0 : i32
    %21 = arith.cmpi ne, %20, %c0_i32_20 : i32
    scf.if %21 {
      %c0_21 = arith.constant 0 : index
      %c0_22 = arith.constant 0 : index
      %22 = vector.load %arg7[%c0_21, %c0_22] : memref<16x1xf32, #tpu.memory_space<vmem>>, vector<16x1xf32>
      %cst_23 = arith.constant 1.000000e+00 : f32
      %23 = vector.broadcast %cst_23 : f32 to vector<16x1xf32>
      %24 = arith.addf %22, %23 : vector<16x1xf32>
      %25 = tpu.reciprocal %24 : vector<16x1xf32> -> vector<16x1xf32>
      %c0_24 = arith.constant 0 : index
      %c0_25 = arith.constant 0 : index
      %26 = vector.load %arg6[%c0_24, %c0_25] : memref<16x32xf32, #tpu.memory_space<vmem>>, vector<16x32xf32>
      %c0_26 = arith.constant 0 : index
      %c0_27 = arith.constant 0 : index
      %c0_28 = arith.constant 0 : index
      %27 = vector.load %arg2[%c0_26, %c0_27, %c0_28] : memref<1x16x32xf32, #tpu.memory_space<vmem>>, vector<1x16x32xf32>
      %28 = vector.shape_cast %27 : vector<1x16x32xf32> to vector<16x32xf32>
      %29 = arith.addf %26, %28 : vector<16x32xf32>
      %30 = vector.broadcast %25 : vector<16x1xf32> to vector<16x32xf32>
      %31 = arith.mulf %29, %30 : vector<16x32xf32>
      %c0_29 = arith.constant 0 : index
      %c0_30 = arith.constant 0 : index
      %c0_31 = arith.constant 0 : index
      %32 = vector.load %arg5[%c0_29, %c0_30, %c0_31] : memref<1x16x32xf32, #tpu.memory_space<vmem>>, vector<1x16x32xf32>
      %33 = vector.shape_cast %32 : vector<1x16x32xf32> to vector<16x32xf32>
      %34 = vector.shape_cast %31 : vector<16x32xf32> to vector<1x16x32xf32>
      tpu.vector_store %arg5[%c0_29, %c0_30, %c0_31], %34 {strides = array<i32>} : memref<1x16x32xf32, #tpu.memory_space<vmem>>, vector<1x16x32xf32>,
    } else {
    }
    return
  }
  func.func @transform_0(%arg0: i32, %arg1: i32) -> (i32, i32, i32) {
    %c0_i32 = arith.constant 0 : i32
    %c0_i32_0 = arith.constant 0 : i32
    %c0_i32_1 = arith.constant 0 : i32
    return %arg0, %c0_i32, %c0_i32_0 : i32, i32, i32
  }
  func.func @transform_1(%arg0: i32, %arg1: i32) -> (i32, i32, i32) {
    %c0_i32 = arith.constant 0 : i32
    %c0_i32_0 = arith.constant 0 : i32
    return %arg0, %arg1, %c0_i32 : i32, i32, i32
  }
  func.func @transform_2(%arg0: i32, %arg1: i32) -> (i32, i32, i32) {
    %c0_i32 = arith.constant 0 : i32
    %c0_i32_0 = arith.constant 0 : i32
    return %arg0, %c0_i32, %arg1 : i32, i32, i32
  }
  func.func @transform_3(%arg0: i32, %arg1: i32) -> (i32, i32, i32) {
    %c0_i32 = arith.constant 0 : i32
    %c0_i32_0 = arith.constant 0 : i32
    %c0_i32_1 = arith.constant 0 : i32
    return %arg0, %c0_i32, %c0_i32_0 : i32, i32, i32
  }
}

</mosaic_0001>

<llo_original>
// kernel: tpu_custom_call.1
$region0: #{tpu_custom_call.1}
  #allocation0 [shape = 'u32[]', space=smem, size = 0x4, offset = 0x4, fixed_abs, tag = 'smem constant byte address 0x4 - core index']
  #allocation1 [shape = 'u32[72,128]{1,0:T(1,128)}', space=vmem, size = 0x9000, scoped, tag = 'internal scratch']
  #allocation2 [shape = 'f32[16,32]{1,0:T(8,128)}', space=vmem, size = 0x2000, scoped, tag = 'scratch operand']
  #allocation3 [shape = 'f32[16,1]{1,0:T(8,128)}', space=vmem, size = 0x2000, scoped, tag = 'scratch operand']
  %s0 = inlined_call_operand.vmem [shape: f32[2,16,32], index: 0, kind: input, shape index: {}]
  %s1 = inlined_call_operand.vmem [shape: f32[2,24,16], index: 1, kind: input, shape index: {}]
  %s2 = inlined_call_operand.vmem [shape: f32[2,16,24], index: 2, kind: input, shape index: {}]
  %s3 = inlined_call_operand.hbm [shape: f32[2,16,32], index: 3, kind: output, shape index: {}]
  %s4 = sld [smem:[#allocation0]]
  $region53: #{tpu_custom_call.1} parent=0
    _
  %s6 = ssub.s32 1, %s4
  %s7 = scalar_select 0, %s6, %s4
  $region1: #{tpu_custom_call.1} parent=0
    #allocation4 [shape = 'u8[16384]{0}', space=vmem, size = 0x4000, scoped, tag = 'output window, operand 0']
    #allocation5 [shape = 's32[2]{0}', space=sflag, size = 0x8, scoped, tag = 'scoped memory for tpu_custom_call.1']
    %8 = vsyncpa [#allocation5], 0
    %s9 = scalar_lea.sflag [#allocation5], 1
    %10 = vsyncpa %s9, 0
    loop: start=0, step=1, limit=4
    $region2: #{tpu_custom_call.1} parent=1 // loop_pre_header
      _
    $region3: #{tpu_custom_call.1} parent=1 // loop_header
      %s12 = sphi 0, %s16
      %p13 = scmp.ge.s32.totalorder %s12, 4
      %s19 = sphi 0, %s31
      %s20 = sphi 0, %s27
      %s21 = sphi 0, %s19
      %s22 = sphi 0, %s20
      %s23 = sphi 0, %s21
      %s24 = sphi 0, %s22
      %s34 = sphi 0, %s36
      %s37 = sphi 0, %s34
      %s38 = sphi 0, %s37
      %s54 = sphi 0, %s38
      %s62 = sphi 0, %s64
      %s65 = sphi 0, %s62
      %s66 = sphi 0, %s65
      %s82 = sphi 0, %s66
      %s90 = sphi 0, %s92
      %s93 = sphi 0, %s90
      %s94 = sphi 0, %s93
      %s110 = sphi 0, %s94
      %s116 = sphi 0, %s118
      %s119 = sphi 0, %s116
      %s120 = sphi 0, %s119
      %s136 = sphi 0, %s120
    $region4: #{tpu_custom_call.1} parent=1 // loop_header_branch
      %15 = sbr.rel (%p13) target = $region8
    $region5: #{tpu_custom_call.1} parent=1 // loop_body
      %s17 = ssub.s32 %s12, 1
      %s18 = ssub.s32 %s12, 2
      %s25 = sadd.s32 1, %s20
      %p26 = scmp.ge.s32.totalorder %s25, 1
      %s27 = scalar_select %p26, 0, %s25
      %s28 = sadd.s32 1, %s19
      %s29 = scalar_select %p26, %s28, %s19
      %p30 = scmp.ge.s32.totalorder %s29, 2
      %s31 = scalar_select %p30, 0, %s29
      %s32 = ssub.s32 %s19, %s31
      %p33 = scmp.eq.s32.totalorder %s32, 0
      %s35 = sadd.s32 %s34, 1
      %s36 = scalar_select %p33, %s34, %s35
      %p39 = pneg %p33
      %p40 = scmp.eq.s32.totalorder %s12, 1
      %p41 = por %p39, %p40
      %p42 = scmp.ne.s32.totalorder %s34, %s37
      %p43 = scmp.eq.s32.totalorder %s12, 0
      %p44 = por %p42, %p43
      %p45 = scmp.ne.s32.totalorder %s34, %s37
      %p46 = scmp.eq.s32.totalorder %s17, 1
      %p47 = por %p45, %p46
      %p48 = scmp.ne.s32.totalorder %s37, %s38
      %p49 = scmp.eq.s32.totalorder %s17, 0
      %p50 = por %p48, %p49
      %p51 = scmp.ne.s32.totalorder %s37, %s38
      %p52 = scmp.eq.s32.totalorder %s18, 1
      %p53 = por %p51, %p52
      %p55 = scmp.ne.s32.totalorder %s38, %s54
      %p56 = scmp.eq.s32.totalorder %s18, 0
      %p57 = por %p55, %p56
      %s58 = ssub.s32 %s19, %s31
      %s59 = ssub.s32 %s20, %s27
      %s60 = sor.u32 %s58, %s59
      %p61 = scmp.eq.s32.totalorder %s60, 0
      %s63 = sadd.s32 %s62, 1
      %s64 = scalar_select %p61, %s62, %s63
      %p67 = pneg %p61
      %p68 = scmp.eq.s32.totalorder %s12, 1
      %p69 = por %p67, %p68
      %p70 = scmp.ne.s32.totalorder %s62, %s65
      %p71 = scmp.eq.s32.totalorder %s12, 0
      %p72 = por %p70, %p71
      %p73 = scmp.ne.s32.totalorder %s62, %s65
      %p74 = scmp.eq.s32.totalorder %s17, 1
      %p75 = por %p73, %p74
      %p76 = scmp.ne.s32.totalorder %s65, %s66
      %p77 = scmp.eq.s32.totalorder %s17, 0
      %p78 = por %p76, %p77
      %p79 = scmp.ne.s32.totalorder %s65, %s66
      %p80 = scmp.eq.s32.totalorder %s18, 1
      %p81 = por %p79, %p80
      %p83 = scmp.ne.s32.totalorder %s66, %s82
      %p84 = scmp.eq.s32.totalorder %s18, 0
      %p85 = por %p83, %p84
      %s86 = ssub.s32 %s19, %s31
      %s87 = ssub.s32 %s20, %s27
      %s88 = sor.u32 %s86, %s87
      %p89 = scmp.eq.s32.totalorder %s88, 0
      %s91 = sadd.s32 %s90, 1
      %s92 = scalar_select %p89, %s90, %s91
      %p95 = pneg %p89
      %p96 = scmp.eq.s32.totalorder %s12, 1
      %p97 = por %p95, %p96
      %p98 = scmp.ne.s32.totalorder %s90, %s93
      %p99 = scmp.eq.s32.totalorder %s12, 0
      %p100 = por %p98, %p99
      %p101 = scmp.ne.s32.totalorder %s90, %s93
      %p102 = scmp.eq.s32.totalorder %s17, 1
      %p103 = por %p101, %p102
      %p104 = scmp.ne.s32.totalorder %s93, %s94
      %p105 = scmp.eq.s32.totalorder %s17, 0
      %p106 = por %p104, %p105
      %p107 = scmp.ne.s32.totalorder %s93, %s94
      %p108 = scmp.eq.s32.totalorder %s18, 1
      %p109 = por %p107, %p108
      %p111 = scmp.ne.s32.totalorder %s94, %s110
      %p112 = scmp.eq.s32.totalorder %s18, 0
      %p113 = por %p111, %p112
      %s114 = ssub.s32 %s19, %s31
      %p115 = scmp.eq.s32.totalorder %s114, 0
      %s117 = sadd.s32 %s116, 1
      %s118 = scalar_select %p115, %s116, %s117
      %p121 = pneg %p115
      %p122 = scmp.eq.s32.totalorder %s12, 1
      %p123 = por %p121, %p122
      %p124 = scmp.ne.s32.totalorder %s116, %s119
      %p125 = scmp.eq.s32.totalorder %s12, 0
      %p126 = por %p124, %p125
      %p127 = scmp.ne.s32.totalorder %s116, %s119
      %p128 = scmp.eq.s32.totalorder %s17, 1
      %p129 = por %p127, %p128
      %p130 = scmp.ne.s32.totalorder %s119, %s120
      %p131 = scmp.eq.s32.totalorder %s17, 0
      %p132 = por %p130, %p131
      %p133 = scmp.ne.s32.totalorder %s119, %s120
      %p134 = scmp.eq.s32.totalorder %s18, 1
      %p135 = por %p133, %p134
      %p137 = scmp.ne.s32.totalorder %s120, %s136
      %p138 = scmp.eq.s32.totalorder %s18, 0
      %p139 = por %p137, %p138
      %p140 = scmp.le.s32.totalorder 1, %s12
      %p141 = scmp.lt.s32.totalorder %s12, 3
      %p142 = pnand %p140, %p141
      %p143 = pneg %p142
      // Predicated region
      $region9: #{tpu_custom_call.1} parent=5 // pred_check
        _
      $region10: #{tpu_custom_call.1} parent=5 // pred_check_branch
        %145 = sbr.rel (%p142) target = $region12
      $region11: #{tpu_custom_call.1} parent=5 // pred_region
        %s146 = ssub.s32 %s12, 1
      $region12: #{tpu_custom_call.1} parent=5 // pred_fallthru
        _
      %p147 = scmp.lt.s32.totalorder %s12, 2
      // Predicated region
      $region13: #{tpu_custom_call.1} parent=5 // pred_check
        %p148 = pneg %p147
      $region14: #{tpu_custom_call.1} parent=5 // pred_check_branch
        %150 = sbr.rel (%p148) target = $region16
      $region15: #{tpu_custom_call.1} parent=5 // pred_region
        // Predicated region
        $region17: #{tpu_custom_call.1} parent=15 // pred_check
          %p151 = pneg %p44
        $region18: #{tpu_custom_call.1} parent=15 // pred_check_branch
          %153 = sbr.rel (%p151) target = $region20
        $region19: #{tpu_custom_call.1} parent=15 // pred_region
          %p154 = scmp.lt.s32.totalorder %s19, 1
          %s155 = scalar_select %p154, %s19, 1
          %s156 = smul.addr %s155, 2
          %s157 = smul.addr %s156, 8
          %s158 = scalar_lea.vmem %s0, %s157
        $region20: #{tpu_custom_call.1} parent=15 // pred_fallthru
          _
        // Predicated region
        $region21: #{tpu_custom_call.1} parent=15 // pred_check
          %p159 = pneg %p72
        $region22: #{tpu_custom_call.1} parent=15 // pred_check_branch
          %161 = sbr.rel (%p159) target = $region24
        $region23: #{tpu_custom_call.1} parent=15 // pred_region
          %s162 = smul.u32 3, %s20
          %p163 = scmp.lt.s32.totalorder %s19, 1
          %s164 = scalar_select %p163, %s19, 1
          %p165 = scmp.lt.s32.totalorder %s162, 2
          %s166 = scalar_select %p165, %s162, 2
          %s167 = smul.addr %s164, 3
          %s168 = sadd.s32 %s166, %s167
          %s169 = smul.addr %s168, 8
          %s170 = scalar_lea.vmem %s1, %s169
          %s171 = smul.u32 3, %s20
        $region24: #{tpu_custom_call.1} parent=15 // pred_fallthru
          _
        // Predicated region
        $region25: #{tpu_custom_call.1} parent=15 // pred_check
          %p172 = pneg %p100
        $region26: #{tpu_custom_call.1} parent=15 // pred_check_branch
          %174 = sbr.rel (%p172) target = $region28
        $region27: #{tpu_custom_call.1} parent=15 // pred_region
          %p175 = scmp.lt.s32.totalorder %s19, 1
          %s176 = scalar_select %p175, %s19, 1
          %p177 = scmp.lt.s32.totalorder %s20, 0
          %s178 = scalar_select %p177, %s20, 0
          %s179 = smul.addr %s176, 2
          %s180 = sadd.s32 %s178, %s179
          %s181 = smul.addr %s180, 8
          %s182 = scalar_lea.vmem %s2, %s181
        $region28: #{tpu_custom_call.1} parent=15 // pred_fallthru
          _
      $region16: #{tpu_custom_call.1} parent=5 // pred_fallthru
        _
      %p183 = scmp.le.s32.totalorder 1, %s12
      %p184 = scmp.lt.s32.totalorder %s12, 3
      %p185 = pnand %p183, %p184
      %p186 = pneg %p185
      // Predicated region
      $region29: #{tpu_custom_call.1} parent=5 // pred_check
        _
      $region30: #{tpu_custom_call.1} parent=5 // pred_check_branch
        %188 = sbr.rel (%p185) target = $region32
      $region31: #{tpu_custom_call.1} parent=5 // pred_region
        %s189 = ssub.s32 %s12, 1
        %p190 = scmp.lt.s32.totalorder %s21, 1
        %s191 = scalar_select %p190, %s21, 1
        %s192 = smul.addr %s191, 2
        %s193 = smul.addr %s192, 8
        %s194 = scalar_lea.vmem %s0, %s193
        %p195 = pneg %p50
        %p196 = pneg %p47
        %s197 = smul.u32 3, %s22
        %p198 = scmp.lt.s32.totalorder %s21, 1
        %s199 = scalar_select %p198, %s21, 1
        %p200 = scmp.lt.s32.totalorder %s197, 2
        %s201 = scalar_select %p200, %s197, 2
        %s202 = smul.addr %s199, 3
        %s203 = sadd.s32 %s201, %s202
        %s204 = smul.addr %s203, 8
        %s205 = scalar_lea.vmem %s1, %s204
        %p206 = pneg %p78
        %p207 = pneg %p75
        %p208 = scmp.lt.s32.totalorder %s21, 1
        %s209 = scalar_select %p208, %s21, 1
        %p210 = scmp.lt.s32.totalorder %s22, 0
        %s211 = scalar_select %p210, %s22, 0
        %s212 = smul.addr %s209, 2
        %s213 = sadd.s32 %s211, %s212
        %s214 = smul.addr %s213, 8
        %s215 = scalar_lea.vmem %s2, %s214
        %p216 = pneg %p106
        %p217 = pneg %p103
        %p218 = pneg %p132
        %p219 = pneg %p129
        %s220 = sand.u32 %s119, 1
        %s221 = scalar_lea.sflag [#allocation5], %s220
        %s222 = sand.u32 %s119, 1
        %s223 = smul.addr %s222, 16
        %s224 = scalar_lea.vmem [#allocation4], %s223
        %p225 = scmp.lt.s32.totalorder %s21, 1
        %s226 = scalar_select %p225, %s21, 1
        %s227 = smul.addr %s226, 2
        %s228 = smul.addr %s227, 8
        %s229 = scalar_lea.vmem %s0, %s228
        %s230 = smul.u32 3, %s22
        %p231 = scmp.lt.s32.totalorder %s21, 1
        %s232 = scalar_select %p231, %s21, 1
        %p233 = scmp.lt.s32.totalorder %s230, 2
        %s234 = scalar_select %p233, %s230, 2
        %s235 = smul.addr %s232, 3
        %s236 = sadd.s32 %s234, %s235
        %s237 = smul.addr %s236, 8
        %s238 = scalar_lea.vmem %s1, %s237
        %s239 = smul.u32 3, %s22
        %p240 = scmp.lt.s32.totalorder %s21, 1
        %s241 = scalar_select %p240, %s21, 1
        %p242 = scmp.lt.s32.totalorder %s22, 0
        %s243 = scalar_select %p242, %s22, 0
        %s244 = smul.addr %s241, 2
        %s245 = sadd.s32 %s243, %s244
        %s246 = smul.addr %s245, 8
        %s247 = scalar_lea.vmem %s2, %s246
        %p248 = scmp.eq.s32.totalorder %s22, 0
        // Predicated region
        $region33: #{tpu_custom_call.1} parent=31 // pred_check
          %p249 = pneg %p248
        $region34: #{tpu_custom_call.1} parent=31 // pred_check_branch
          %251 = sbr.rel (%p249) target = $region36
        $region35: #{tpu_custom_call.1} parent=31 // pred_region
          %vm252 = vcmask 261120
          %253 = vst.msk [vmem:[#allocation2] sm:$0xff] %vm252, 0.0
          %254 = vst.msk [vmem:[#allocation2 + $0x8] sm:$0xff] %vm252, 0.0
          %vm255 = vcmask 7168
          %256 = vst.msk [vmem:[#allocation3] sm:$0xff] %vm255, 0.0
          %257 = vst.msk [vmem:[#allocation3 + $0x8] sm:$0xff] %vm255, 0.0
        $region36: #{tpu_custom_call.1} parent=31 // pred_fallthru
          _
        %v258 = vld [vmem:[%s238] sm:$0xff]
        %v259 = vld [vmem:[%s238 + $0x8] sm:$0xff]
        %v260 = vld [vmem:[%s238 + $0x10] sm:$0xff]
        %v261 = vld [vmem:[%s247] sm:$0xff]
        %v262 = vld [vmem:[%s247 + $0x8] sm:$0xff]
        %v263 = vld [vmem:[%s229] sm:$0xff]
        %v264 = vld [vmem:[%s229 + $0x8] sm:$0xff]
        %vm265 = vcmask 130048
        %v267 = vsel %vm265, %v258, 0
        %v270 = vsel %vm265, %v259, 0
        %v273 = vsel %vm265, %v260, 0
        %275 = vmatpush.msra.mxu0 0.0
        %276 = vmatpush.msra.mxu0 0.0
        %277 = vmatpush.msra.mxu0 0.0
        %278 = vmatpush.msra.mxu0 0.0
        %279 = vmatpush.msra.mxu0 0.0
        %280 = vmatpush.msra.mxu0 0.0
        %281 = vmatpush.msra.mxu0 0.0
        %282 = vmatpush.msra.mxu0 0.0
        %283 = vmatpush.msra.mxu0 0.0
        %284 = vmatpush.msra.mxu0 0.0
        %285 = vmatpush.msra.mxu0 0.0
        %286 = vmatpush.msra.mxu0 0.0
        %287 = vmatpush.msra.mxu0 0.0
        %288 = vmatpush.msra.mxu0 0.0
        %289 = vmatpush.msra.mxu0 %v264
        %290 = vmatpush.msra.mxu0 %v263
        %291 = vmatmul.f32.gmra.mxu0 %v267
        %v292 = vpop.f32.mrf.mxu0
        %v293 = vadd.f32 0.0, %v292
        %294 = vmatmul.f32.gmra.mxu0 %v270
        %v295 = vpop.f32.mrf.mxu0
        %v296 = vadd.f32 0.0, %v295
        %297 = vmatmul.f32.gmra.mxu0 %v273
        %v298 = vpop.f32.mrf.mxu0
        %v299 = vadd.f32 0.0, %v298
        %300 = vdwg.mxu0
        %v301 = vld [vmem:[#allocation2] sm:$0xff]
        %v302 = vld [vmem:[#allocation2 + $0x8] sm:$0xff]
        %vm303 = vcmask 195584
        %v305 = vsel %vm303, %v261, 0
        %v308 = vsel %vm303, %v262, 0
        %310 = vmatpush.msra.mxu0 0.0
        %311 = vmatpush.msra.mxu0 0.0
        %312 = vmatpush.msra.mxu0 0.0
        %313 = vmatpush.msra.mxu0 0.0
        %314 = vmatpush.msra.mxu0 0.0
        %315 = vmatpush.msra.mxu0 0.0
        %316 = vmatpush.msra.mxu0 0.0
        %317 = vmatpush.msra.mxu0 0.0
        %318 = vmatpush.msra.mxu0 0.0
        %319 = vmatpush.msra.mxu0 0.0
        %320 = vmatpush.msra.mxu0 0.0
        %321 = vmatpush.msra.mxu0 0.0
        %322 = vmatpush.msra.mxu0 0.0
        %323 = vmatpush.msra.mxu0 %v299
        %324 = vmatpush.msra.mxu0 %v296
        %325 = vmatpush.msra.mxu0 %v293
        %326 = vmatmul.f32.gmra.mxu0 %v305
        %v327 = vpop.f32.mrf.mxu0
        %v328 = vadd.f32 0.0, %v327
        %329 = vmatmul.f32.gmra.mxu0 %v308
        %v330 = vpop.f32.mrf.mxu0
        %v331 = vadd.f32 0.0, %v330
        %332 = vdwg.mxu0
        %v333 = vadd.f32 %v301, %v328
        %v334 = vadd.f32 %v302, %v331
        %vm335 = vcmask 261120
        %336 = vst.msk [vmem:[#allocation2] sm:$0xff] %vm335, %v333
        %337 = vst.msk [vmem:[#allocation2 + $0x8] sm:$0xff] %vm335, %v334
        %v338 = vld [vmem:[#allocation3] sm:$0xff]
        %v339 = vld [vmem:[#allocation3 + $0x8] sm:$0xff]
        %v340 = vsel %vm303, %v261, 0.0
        %341 = vadd.xlane.f32.xlu0 %v340
        %v342 = vpop.xlane.xlu0 %341
        %v343 = vsel %vm303, %v262, 0.0
        %344 = vadd.xlane.f32.xlu0 %v343
        %v345 = vpop.xlane.xlu0 %344
        %v346 = vadd.f32 %v338, %v342
        %v347 = vadd.f32 %v339, %v345
        %vm348 = vcmask 7168
        %349 = vst.msk [vmem:[#allocation3] sm:$0xff] %vm348, %v346
        %350 = vst.msk [vmem:[#allocation3 + $0x8] sm:$0xff] %vm348, %v347
        // Predicated region
        $region37: #{tpu_custom_call.1} parent=31 // pred_check
          %p351 = pneg %p248
        $region38: #{tpu_custom_call.1} parent=31 // pred_check_branch
          %353 = sbr.rel (%p351) target = $region40
        $region39: #{tpu_custom_call.1} parent=31 // pred_region
          %v354 = vld [vmem:[#allocation3] sm:$0xff]
          %v355 = vld [vmem:[#allocation3 + $0x8] sm:$0xff]
          %v356 = vadd.f32 %v354, 1.0
          %v357 = vadd.f32 %v355, 1.0
          %v358 = vrcp.pop %v356
          %v359 = vmul.f32 %v356, %v358
          %v360 = vsub.f32 1.0, %v359
          %v361 = vmul.f32 %v358, %v360
          %v362 = vadd.f32 %v358, %v361
          %vm363 = vweird.f32 %v356
          %vm364 = vweird.f32 %v358
          %vm365 = vmor %vm363, %vm364
          %v366 = vsel %vm365, %v358, %v362
          %v367 = vand.u32 2147483647, %v356
          %vm368 = vcmp.eq.f32.partialorder %v367, 8.507059e+37
          %v369 = vand.u32 %v356, 2147483648
          %v370 = vor.u32 1.1754944e-38, %v369
          %v371 = vsel %vm368, %v370, %v366
          %v372 = vrcp.pop %v357
          %v373 = vmul.f32 %v357, %v372
          %v374 = vsub.f32 1.0, %v373
          %v375 = vmul.f32 %v372, %v374
          %v376 = vadd.f32 %v372, %v375
          %vm377 = vweird.f32 %v357
          %vm378 = vweird.f32 %v372
          %vm379 = vmor %vm377, %vm378
          %v380 = vsel %vm379, %v372, %v376
          %v381 = vand.u32 2147483647, %v357
          %vm382 = vcmp.eq.f32.partialorder %v381, 8.507059e+37
          %v383 = vand.u32 %v357, 2147483648
          %v384 = vor.u32 1.1754944e-38, %v383
          %v385 = vsel %vm382, %v384, %v380
          %v386 = vld [vmem:[#allocation2] sm:$0xff]
          %v387 = vld [vmem:[#allocation2 + $0x8] sm:$0xff]
          %v388 = vld [vmem:[%s229] sm:$0xff]
          %v389 = vld [vmem:[%s229 + $0x8] sm:$0xff]
          %v390 = vadd.f32 %v386, %v388
          %v391 = vadd.f32 %v387, %v389
          %393 = vset.pattern.permute.xlu0 0
          %394 = vperm.xlu0 %393, %v371
          %v395 = vpop.permute.xlu0 %394
          %398 = vset.pattern.permute.xlu0 0
          %399 = vperm.xlu0 %398, %v385
          %v400 = vpop.permute.xlu0 %399
          %v402 = vmul.f32 %v390, %v395
          %v403 = vmul.f32 %v391, %v400
          %404 = vst.msk [vmem:[%s224] sm:$0xff] %vm335, %v402
          %405 = vst.msk [vmem:[%s224 + $0x8] sm:$0xff] %vm335, %v403
        $region40: #{tpu_custom_call.1} parent=31 // pred_fallthru
          _
        %s406 = sand.u32 %s119, 1
        %s407 = scalar_lea.sflag [#allocation5], %s406
        %s408 = sand.u32 %s119, 1
        %s409 = smul.addr %s408, 16
        %s410 = scalar_lea.vmem [#allocation4], %s409
        // Predicated region
        $region41: #{tpu_custom_call.1} parent=31 // pred_check
          %p411 = pneg %p129
        $region42: #{tpu_custom_call.1} parent=31 // pred_check_branch
          %413 = sbr.rel (%p411) target = $region44
        $region43: #{tpu_custom_call.1} parent=31 // pred_region
          %415 = vsyncadd %s407, 0
          %s416 = smul.addr %s21, 2
          %s417 = smul.addr %s416, 8
          %s418 = scalar_lea.hbm %s3, %s417
          %s419 = sshll.u32 %s410, 4
          %s420 = int_to_ptr.vmem [resolvable:$true] %s419
          %s421 = sshll.u32 %s418, 4
          %s422 = int_to_ptr.hbm [resolvable:$true] %s421
          %427 = dma.vmem_to_hbm [thread:$0]  %s420, 256, %s422, %s407, 128, 128, 8
        $region44: #{tpu_custom_call.1} parent=31 // pred_fallthru
          _
      $region32: #{tpu_custom_call.1} parent=5 // pred_fallthru
        _
      %p428 = scmp.le.s32.totalorder 2, %s12
      // Predicated region
      $region45: #{tpu_custom_call.1} parent=5 // pred_check
        %p429 = pneg %p428
      $region46: #{tpu_custom_call.1} parent=5 // pred_check_branch
        %431 = sbr.rel (%p429) target = $region48
      $region47: #{tpu_custom_call.1} parent=5 // pred_region
        %s432 = ssub.s32 %s12, 2
        // Predicated region
        $region49: #{tpu_custom_call.1} parent=47 // pred_check
          %p433 = pneg %p135
        $region50: #{tpu_custom_call.1} parent=47 // pred_check_branch
          %435 = sbr.rel (%p433) target = $region52
        $region51: #{tpu_custom_call.1} parent=47 // pred_region
          %s436 = sand.u32 %s120, 1
          %s437 = scalar_lea.sflag [#allocation5], %s436
          %s438 = sand.u32 %s120, 1
          %s439 = smul.addr %s438, 16
          %s440 = scalar_lea.vmem [#allocation4], %s439
          %442 = dma.done %s437, 256
        $region52: #{tpu_custom_call.1} parent=47 // pred_fallthru
          _
      $region48: #{tpu_custom_call.1} parent=5 // pred_fallthru
        _
    $region6: #{tpu_custom_call.1} parent=1 // loop_footer
      %s16 = sadd.s32 1, %s12
    $region7: #{tpu_custom_call.1} parent=1 // loop_footer_branch
      %11 = sbr.rel target = $region3
    $region8: #{tpu_custom_call.1} parent=1 // loop_exit
      _
    %443 = vsyncpa [#allocation5], 1
    %s444 = scalar_lea.sflag [#allocation5], 1
    %445 = vsyncpa %s444, 1

</llo_original>
